<compile_context>
chip_gen: v7x
topology: tpu7x:2x2x1
jax: 0.10.0
libtpu: 0.0.40
codegen_flags: <defaults>
</compile_context>

<pallas_src>
import jax
import jax.numpy as jnp
from jax.experimental import pallas as pl
from jax.experimental.pallas import tpu as pltpu


# ---------------------------------------------------------------------------
# Kernels
# ---------------------------------------------------------------------------

def _conv1x1_kernel_vpu(w_ref, b_ref, x_ref, o_ref):
    """Small-C path: VPU broadcast-multiply + sublane reduction (no MXU).

    w_ref: (C, 1) f32 VMEM (resident); b_ref: (1,) f32 SMEM
    x_ref: (bn, C, tile) VMEM (native dtype); o_ref: (bn, 1, tile) VMEM
    """
    x = x_ref[...].astype(jnp.float32)                       # f32 accumulate
    acc = jnp.sum(x * w_ref[...], axis=1, keepdims=True)     # (bn, 1, tile)
    o_ref[...] = (acc + b_ref[0]).astype(o_ref.dtype)


def _conv1x1_kernel_mxu(w_ref, b_ref, x_ref, o_ref):
    """Large-C path: (1,C)@(C,tile) MXU dot per image in the batch block.

    w_ref: (1, C) VMEM (resident, compute dtype); b_ref: (1,) f32 SMEM
    x_ref: (bn, C, tile) VMEM; o_ref: (bn, 1, tile) VMEM
    """
    w = w_ref[...]
    for b in range(x_ref.shape[0]):        # bn is static and <= 8 on this path
        acc = jnp.dot(w, x_ref[b].astype(w.dtype),
                      preferred_element_type=jnp.float32)
        o_ref[b] = (acc + b_ref[0]).astype(o_ref.dtype)


# ---------------------------------------------------------------------------
# Tiling helpers (padding-aware, per-generation)
# ---------------------------------------------------------------------------

def _round_up(v, m):
    return ((v + m - 1) // m) * m


def _sublane(dtype):
    return {4: 8, 2: 16, 1: 32}.get(jnp.dtype(dtype).itemsize, 8)


def _vmem_capacity_bytes():
    try:
        cap = int(pltpu.get_tpu_info().vmem_capacity_bytes)
        if cap > 0:
            return cap
    except Exception:
        pass
    return 64 * 1024 * 1024   # conservative fallback (v7x-sized VMEM)


def _num_tensorcores():
    try:
        info = pltpu.get_tpu_info()
    except Exception:
        return 1
    for name in ("num_cores", "cores_per_chip", "tensorcores_per_chip",
                 "num_tensorcores"):
        v = getattr(info, name, None)
        if v:
            try:
                return int(v)
            except Exception:
                pass
    return 1


def _choose_tiling(N, C, HW, x_dtype, out_dtype, use_vpu):
    """Pick (batch block, HW lane tile, vmem limit) with padding-aware budget."""
    x_sz = jnp.dtype(x_dtype).itemsize
    o_sz = jnp.dtype(out_dtype).itemsize
    c_pad = _round_up(C, _sublane(x_dtype))    # channels pad to sublane multiple
    o_rows = _sublane(out_dtype)               # 1 output row pads to a sublane group

    cap = _vmem_capacity_bytes()
    # ~3/4 of VMEM for the pipeline: ~96 MiB on 128 MiB chips, ~48 MiB on v7x.
    vmem_limit = min(cap * 3 // 4, 100 * 1024 * 1024)
    budget = vmem_limit - 2 * 1024 * 1024      # headroom: weight + internal scratch

    # Batch-block tiny planes so each grid step moves a multi-hundred-KiB DMA.
    plane_bytes = c_pad * _round_up(HW, 128) * x_sz
    if plane_bytes < (1 << 20):
        bn = max(1, min(N, (1 << 20) // max(plane_bytes, 1)))
    else:
        bn = 1
    if not use_vpu:
        bn = min(bn, 8)    # MXU path unrolls bn dots in-kernel; keep it short.

    # Bytes per lane of tile_hw: double-buffered x tile + double-buffered out tile.
    per_lane = 2 * bn * (c_pad * x_sz + o_rows * o_sz)
    max_tile = max(128, (budget // per_lane) // 128 * 128)
    tile_hw = HW if HW <= max_tile else min(max_tile, 128 * 1024)
    return bn, tile_hw, int(vmem_limit)


# ---------------------------------------------------------------------------
# Wrapper
# ---------------------------------------------------------------------------

def fully_conv_layer_pallas(x_nchw, weight, bias):
    """1x1 conv: out[n,0,h,w] = sum_c x[n,c,h,w] * weight[0,c,0,0] + bias[0].

    x_nchw: (N, C, H, W); weight: (1, C, 1, 1); bias: (1,)
    returns (N, 1, H, W) in x's (floating) dtype.
    """
    N, C, H, W = x_nchw.shape
    HW = H * W

    out_dtype = (x_nchw.dtype
                 if x_nchw.dtype in (jnp.float32, jnp.bfloat16)
                 else jnp.float32)
    use_vpu = C <= 32

    # Free reshape only: keep x in its native dtype (no extra HBM pass).
    x_flat = x_nchw.reshape(N, C, HW)

    if use_vpu:
        w_arr = weight.reshape(C, 1).astype(jnp.float32)
        w_spec = pl.BlockSpec((C, 1), lambda n, t: (0, 0))
        kernel = _conv1x1_kernel_vpu
    else:
        w_dtype = jnp.bfloat16 if x_nchw.dtype == jnp.bfloat16 else jnp.float32
        w_arr = weight.reshape(1, C).astype(w_dtype)
        w_spec = pl.BlockSpec((1, C), lambda n, t: (0, 0))
        kernel = _conv1x1_kernel_mxu

    b_arr = bias.reshape(1).astype(jnp.float32)

    bn, tile_hw, vmem_limit = _choose_tiling(
        N, C, HW, x_flat.dtype, out_dtype, use_vpu)
    grid = (pl.cdiv(N, bn), pl.cdiv(HW, tile_hw))

    def _call(dim_sems):
        return pl.pallas_call(
            kernel,
            out_shape=jax.ShapeDtypeStruct((N, 1, HW), out_dtype),
            grid_spec=pltpu.PrefetchScalarGridSpec(
                num_scalar_prefetch=0,
                grid=grid,
                in_specs=[
                    # weight: full block, constant index -> resident in VMEM
                    w_spec,
                    # bias: single scalar in SMEM
                    pl.BlockSpec(memory_space=pltpu.MemorySpace.SMEM),
                    # x: batch-blocked, lane-dense HW tiles
                    pl.BlockSpec((bn, C, tile_hw), lambda n, t: (n, 0, t)),
                ],
                out_specs=pl.BlockSpec((bn, 1, tile_hw), lambda n, t: (n, 0, t)),
            ),
            compiler_params=pltpu.CompilerParams(
                dimension_semantics=dim_sems,
                vmem_limit_bytes=vmem_limit,
            ),
        )(w_arr, b_arr, x_flat)

    # v7x: split the grid across the 2 TensorCores; plain PARALLEL elsewhere.
    ncores = _num_tensorcores()
    if ncores > 1 and grid[0] >= ncores:
        try:
            y = _call((pltpu.CORE_PARALLEL, pltpu.PARALLEL))
        except Exception:
            y = _call((pltpu.PARALLEL, pltpu.PARALLEL))
    else:
        y = _call((pltpu.PARALLEL, pltpu.PARALLEL))

    return y.reshape(N, 1, H, W)


# ---------------------------------------------------------------------------
# Self-test
# ---------------------------------------------------------------------------

if __name__ == "__main__":
    key = jax.random.PRNGKey(0)
    k_x, k_w, k_b = jax.random.split(key, 3)

    N, C, H, W = 2, 4, 16, 16
    x = jax.random.normal(k_x, (N, C, H, W), dtype=jnp.float32)

    # Deterministic synthetic parameters (shapes from nn.Conv2d(c, 1, 1)).
    weight = jax.random.normal(k_w, (1, C, 1, 1), dtype=jnp.float32) * 0.1
    bias = jax.random.normal(k_b, (1,), dtype=jnp.float32) * 0.1

    out = fully_conv_layer_pallas(x, weight, bias)
    out = jax.block_until_ready(out)

    # Reference: plain-JAX 1x1 conv (channel reduction + bias).
    ref = jnp.einsum("nchw,c->nhw", x, weight.reshape(C))[:, None, :, :] + bias[0]

    assert out.shape == (N, 1, H, W), out.shape
    assert out.dtype == x.dtype, out.dtype
    assert jnp.allclose(out, ref, atol=1e-5, rtol=1e-5), "mismatch vs reference"

    print("KERNEL_OK")
</pallas_src>

<mosaic_0001>
module attributes {stable_mosaic.version = 11 : i64} {
  func.func @_conv1x1_kernel_vpu(%arg0: i32, %arg1: i32, %arg2: memref<4x1xf32, #tpu.memory_space<vmem>>, %arg3: memref<1xf32, #tpu.memory_space<smem>>, %arg4: memref<2x4x256xf32, #tpu.memory_space<vmem>>, %arg5: memref<2x1x256xf32, #tpu.memory_space<vmem>>) attributes {dimension_semantics = [#tpu.dimension_semantics<parallel>, #tpu.dimension_semantics<parallel>], iteration_bounds = array<i64: 1, 1>, scalar_prefetch = 0 : i64, scratch_operands = 0 : i64, tpu.core_type = #tpu.core_type<tc>, window_params = [{pipeline_mode = #tpu.pipeline_mode<synchronous>, transform_indices = @transform_0, window_bounds = array<i64: 4, 1>}, {transform_indices = @transform_1, window_bounds = array<i64: 1>}, {transform_indices = @transform_2, window_bounds = array<i64: 2, 4, 256>}, {transform_indices = @transform_3, window_bounds = array<i64: 2, 1, 256>}]} {
    %c0 = arith.constant 0 : index
    %c0_0 = arith.constant 0 : index
    %c0_1 = arith.constant 0 : index
    %0 = vector.load %arg4[%c0, %c0_0, %c0_1] : memref<2x4x256xf32, #tpu.memory_space<vmem>>, vector<2x4x256xf32>
    %c0_2 = arith.constant 0 : index
    %c0_3 = arith.constant 0 : index
    %1 = vector.load %arg2[%c0_2, %c0_3] : memref<4x1xf32, #tpu.memory_space<vmem>>, vector<4x1xf32>
    %2 = vector.shape_cast %1 : vector<4x1xf32> to vector<1x4x1xf32>
    %3 = vector.broadcast %2 : vector<1x4x1xf32> to vector<2x4x256xf32>
    %4 = arith.mulf %0, %3 : vector<2x4x256xf32>
    %cst = arith.constant dense<0.000000e+00> : vector<2x256xf32>
    %5 = vector.multi_reduction <add>, %4, %cst [1] : vector<2x4x256xf32> to vector<2x256xf32>
    %6 = vector.shape_cast %5 : vector<2x256xf32> to vector<2x1x256xf32>
    %c0_4 = arith.constant 0 : index
    %7 = memref.load %arg3[%c0_4] : memref<1xf32, #tpu.memory_space<smem>>
    %8 = vector.broadcast %7 : f32 to vector<2x1x256xf32>
    %9 = arith.addf %6, %8 : vector<2x1x256xf32>
    %c0_5 = arith.constant 0 : index
    %c0_6 = arith.constant 0 : index
    %c0_7 = arith.constant 0 : index
    %10 = vector.load %arg5[%c0_5, %c0_6, %c0_7] : memref<2x1x256xf32, #tpu.memory_space<vmem>>, vector<2x1x256xf32>
    tpu.vector_store %arg5[%c0_5, %c0_6, %c0_7], %9 {strides = array<i32>} : memref<2x1x256xf32, #tpu.memory_space<vmem>>, vector<2x1x256xf32>,
    return
  }
  func.func @transform_0(%arg0: i32, %arg1: i32) -> (i32, i32) {
    %c0_i32 = arith.constant 0 : i32
    %c0_i32_0 = arith.constant 0 : i32
    %c0_i32_1 = arith.constant 0 : i32
    return %c0_i32, %c0_i32_0 : i32, i32
  }
  func.func @transform_1(%arg0: i32, %arg1: i32) -> i32 {
    %c0_i32 = arith.constant 0 : i32
    %c0_i32_0 = arith.constant 0 : i32
    return %c0_i32 : i32
  }
  func.func @transform_2(%arg0: i32, %arg1: i32) -> (i32, i32, i32) {
    %c0_i32 = arith.constant 0 : i32
    %c0_i32_0 = arith.constant 0 : i32
    return %arg0, %c0_i32, %arg1 : i32, i32, i32
  }
  func.func @transform_3(%arg0: i32, %arg1: i32) -> (i32, i32, i32) {
    %c0_i32 = arith.constant 0 : i32
    %c0_i32_0 = arith.constant 0 : i32
    return %arg0, %c0_i32, %arg1 : i32, i32, i32
  }
}

</mosaic_0001>

<llo_original>
// kernel: tpu_custom_call.1
$region0: #{tpu_custom_call.1}
  #allocation0 [shape = 'u32[]', space=smem, size = 0x4, offset = 0x4, fixed_abs, tag = 'smem constant byte address 0x4 - core index']
  #allocation1 [shape = 'u32[144,128]{1,0:T(1,128)}', space=vmem, size = 0x12000, scoped, tag = 'internal scratch']
  #allocation2 [shape = 'f32[1]{0:T(128)S(6)}', space=smem, size = 0x200, scoped, tag = 'scoped memory for tpu_custom_call.1']
  %s0 = inlined_call_operand.vmem [shape: f32[4,1], index: 0, kind: input, shape index: {}]
  %s1 = inlined_call_operand.<no memory space> [shape: f32[1], index: 1, kind: input, shape index: {}]
  %s2 = inlined_call_operand.hbm [shape: f32[2,4,256], index: 2, kind: input, shape index: {}]
  %s3 = inlined_call_operand.hbm [shape: f32[2,1,256], index: 3, kind: output, shape index: {}]
  %s4 = sld [smem:[#allocation0]]
  $region26: #{tpu_custom_call.1} parent=0
    _
  %s6 = ssub.s32 1, %s4
  %s7 = scalar_select 0, %s6, %s4
  %8 = sst [smem:[#allocation2]] %s1
  $region1: #{tpu_custom_call.1} parent=0
    #allocation3 [shape = 'u8[8192]{0}', space=vmem, size = 0x2000, scoped, tag = 'input window, operand 2, single buffered']
    #allocation4 [shape = 's32[1]{0}', space=sflag, size = 0x4, scoped, tag = 'scoped memory for tpu_custom_call.1']
    #allocation5 [shape = 's32[1]{0}', space=sflag, size = 0x4, scoped, tag = 'scoped memory for tpu_custom_call.1']
    #allocation6 [shape = 'u8[2048]{0}', space=vmem, size = 0x800, scoped, tag = 'output window, operand 0, single buffered']
    %9 = vsyncpa [#allocation4], 0
    %10 = vsyncpa [#allocation5], 0
    // Predicated region
    $region2: #{tpu_custom_call.1} parent=1 // pred_check
      _
    $region3: #{tpu_custom_call.1} parent=1 // pred_check_branch
      %12 = sbr.rel (0) target = $region5
    $region4: #{tpu_custom_call.1} parent=1 // pred_region
      _
    $region5: #{tpu_custom_call.1} parent=1 // pred_fallthru
      _
    // Predicated region
    $region6: #{tpu_custom_call.1} parent=1 // pred_check
      _
    $region7: #{tpu_custom_call.1} parent=1 // pred_check_branch
      %14 = sbr.rel (0) target = $region9
    $region8: #{tpu_custom_call.1} parent=1 // pred_region
      _
    $region9: #{tpu_custom_call.1} parent=1 // pred_fallthru
      _
    // Predicated region
    $region10: #{tpu_custom_call.1} parent=1 // pred_check
      _
    $region11: #{tpu_custom_call.1} parent=1 // pred_check_branch
      %16 = sbr.rel (0) target = $region13
    $region12: #{tpu_custom_call.1} parent=1 // pred_region
      %s18 = ssub.s32 256, 256
      %19 = vsyncadd [#allocation4], %s18
      %s20 = sshll.u32 [#allocation3], 4
      %s21 = int_to_ptr.vmem [resolvable:$true] %s20
      %26 = dma.hbm_to_vmem [thread:$0]  %s2, 256, %s21, [#allocation4], 128, 128, 8
    $region13: #{tpu_custom_call.1} parent=1 // pred_fallthru
      _
    // Predicated region
    $region14: #{tpu_custom_call.1} parent=1 // pred_check
      _
    $region15: #{tpu_custom_call.1} parent=1 // pred_check_branch
      %28 = sbr.rel (0) target = $region17
    $region16: #{tpu_custom_call.1} parent=1 // pred_region
      %29 = dma.done [#allocation4], 256
    $region17: #{tpu_custom_call.1} parent=1 // pred_fallthru
      _
    %v30 = vld [vmem:[#allocation3] sm:$0xff]
    %v31 = vld [vmem:[#allocation3 + $0x8] sm:$0xff]
    %v32 = vld [vmem:[%s0] sm:$0xf]
    %34 = vset.pattern.permute.xlu0 0
    %35 = vperm.xlu0 %34, %v32
    %v36 = vpop.permute.xlu0 %35
    %v38 = vunpack.c.l.s4 839922192
    %v39 = vunpack.c.0.s8 %v38
    %v40 = vlaneseq
    %v41 = vshrl.u32 %v40, 7
    %v42 = vsub.s32 %v39, %v41
    %v43 = vrot.slane %v36, %v42
    %v45 = vmul.f32 %v30, %v43
    %v46 = vmul.f32 %v31, %v43
    %v49 = vcombine.high %v45, %v45
    %v50 = vcombine.high %v46, %v46
    %vm53 = vcmask 1043456
    %v54 = vsel %vm53, %v45, 0.0
    %v55 = vrot.slane %v54, 4
    %v56 = vadd.f32 %v54, %v55
    %v57 = vrot.slane %v56, 2
    %v58 = vadd.f32 %v56, %v57
    %v59 = vrot.slane %v58, 1
    %v60 = vadd.f32 %v58, %v59
    %v61 = vsel %vm53, %v49, 0.0
    %v62 = vrot.slane %v61, 4
    %v63 = vadd.f32 %v61, %v62
    %v64 = vrot.slane %v63, 2
    %v65 = vadd.f32 %v63, %v64
    %v66 = vrot.slane %v65, 1
    %v67 = vadd.f32 %v65, %v66
    %v68 = vsel %vm53, %v46, 0.0
    %v69 = vrot.slane %v68, 4
    %v70 = vadd.f32 %v68, %v69
    %v71 = vrot.slane %v70, 2
    %v72 = vadd.f32 %v70, %v71
    %v73 = vrot.slane %v72, 1
    %v74 = vadd.f32 %v72, %v73
    %v75 = vsel %vm53, %v50, 0.0
    %v76 = vrot.slane %v75, 4
    %v77 = vadd.f32 %v75, %v76
    %v78 = vrot.slane %v77, 2
    %v79 = vadd.f32 %v77, %v78
    %v80 = vrot.slane %v79, 1
    %v81 = vadd.f32 %v79, %v80
    %s82 = sld [smem:[#allocation2]]
    %v83 = vstv %s82
    %v84 = vadd.f32 %v60, %v83
    %v85 = vadd.f32 %v67, %v83
    %v86 = vadd.f32 %v74, %v83
    %v87 = vadd.f32 %v81, %v83
    %v92 = vcombine.low %v84, %v85
    %v94 = vunpack.c.l.s4 1966171168
    %v95 = vunpack.c.0.s8 %v94
    %v96 = vlaneseq
    %v97 = vshrl.u32 %v96, 7
    %v98 = vsub.s32 %v95, %v97
    %v99 = vrot.slane %v92, %v98
    %v101 = vunpack.c.l.s4 1966171168
    %v102 = vunpack.c.0.s8 %v101
    %v103 = vlaneseq
    %v104 = vshrl.u32 %v103, 7
    %v105 = vsub.s32 %v102, %v104
    %v106 = vrot.slane %v99, %v105
    %v107 = vcombine.low %v86, %v87
    %v109 = vunpack.c.l.s4 1966171168
    %v110 = vunpack.c.0.s8 %v109
    %v111 = vlaneseq
    %v112 = vshrl.u32 %v111, 7
    %v113 = vsub.s32 %v110, %v112
    %v114 = vrot.slane %v107, %v113
    %v116 = vunpack.c.l.s4 1966171168
    %v117 = vunpack.c.0.s8 %v116
    %v118 = vlaneseq
    %v119 = vshrl.u32 %v118, 7
    %v120 = vsub.s32 %v117, %v119
    %v121 = vrot.slane %v114, %v120
    %v124 = vlaneseq
    %vm125 = vcmp.ge.s32.totalorder %v124, 0
    %vm126 = vcmp.lt.s32.totalorder %v124, 256
    %vm127 = vmand %vm125, %vm126
    %128 = vst.msk [vmem:[#allocation6] sm:$0x3] %vm127, %v106
    %129 = vst.msk [vmem:[#allocation6 + $0x2] sm:$0x3] %vm127, %v121
    // Predicated region
    $region18: #{tpu_custom_call.1} parent=1 // pred_check
      _
    $region19: #{tpu_custom_call.1} parent=1 // pred_check_branch
      %131 = sbr.rel (0) target = $region21
    $region20: #{tpu_custom_call.1} parent=1 // pred_region
      %s133 = ssub.s32 64, 64
      %134 = vsyncadd [#allocation5], %s133
      %s135 = sshll.u32 [#allocation6], 4
      %s136 = int_to_ptr.vmem [resolvable:$true] %s135
      %141 = dma.vmem_to_hbm [thread:$0]  %s136, 64, %s3, [#allocation5], 32, 32, 2
    $region21: #{tpu_custom_call.1} parent=1 // pred_fallthru
      _
    // Predicated region
    $region22: #{tpu_custom_call.1} parent=1 // pred_check
      _
    $region23: #{tpu_custom_call.1} parent=1 // pred_check_branch
      %143 = sbr.rel (0) target = $region25
    $region24: #{tpu_custom_call.1} parent=1 // pred_region
      %144 = dma.done [#allocation5], 64
    $region25: #{tpu_custom_call.1} parent=1 // pred_fallthru
      _
    %145 = vsyncpa [#allocation4], 1
    %146 = vsyncpa [#allocation5], 1

</llo_original>
